<compile_context>
chip_gen: v7x
topology: tpu7x:2x2x1
jax: 0.10.0
libtpu: 0.0.40
codegen_flags: <defaults>
</compile_context>

<pallas_src>
import functools

import jax
import jax.numpy as jnp
from jax import lax
from jax.experimental import pallas as pl
from jax.experimental.pallas import tpu as pltpu


def _round_up(x, m):
    return (x + m - 1) // m * m


@functools.lru_cache(maxsize=None)
def _vmem_capacity_bytes():
    """Physical VMEM per TensorCore (128 MiB on v5e/v6e, 64 MiB on v7x)."""
    try:
        info = pltpu.get_tpu_info()
        cap = int(getattr(info, "vmem_capacity_bytes"))
        if cap > 0:
            return cap
    except Exception:
        pass
    return 64 * 1024 * 1024  # conservative fallback (v7x-sized)


def _choose_tk(m, k_pad, itemsize, n_buf, tile_budget):
    """Largest 128-multiple divisor of k_pad whose n_buf-deep feature tiles fit
    `tile_budget` bytes; prefer an even number of K steps (enables the 2-way
    core split on multi-TC chips) unless that shrinks the tile by > 2x."""
    units = k_pad // 128
    tk_max_units = max(1, tile_budget // (n_buf * m * itemsize * 128))
    divs = [d for d in range(1, units + 1)
            if units % d == 0 and d <= tk_max_units]
    if not divs:
        divs = [1]
    best = max(divs)
    even = [d for d in divs if (units // d) % 2 == 0]
    if even:
        cand = max(even)
        if 2 * cand >= best:
            best = cand
    return best * 128


def _plan(m, k, itemsize):
    """Static (trace-time) tiling plan for an (M, K) feature matrix."""
    k_pad = _round_up(k, 128)
    phys = _vmem_capacity_bytes()
    resident_out = 2 * m * m * 4              # resident Gram block (x2 writeback)
    # ~65% of physical VMEM for streamed tiles (=> ~80+ MiB on v5e/v6e,
    # ~40 MiB on v7x), leaving room for the resident output + compiler slack.
    tile_budget = max(int(phys * 0.65) - resident_out,
                      3 * m * 128 * itemsize)
    tk = _choose_tk(m, k_pad, itemsize, 3, tile_budget)

    total_steps = k_pad // tk
    n_splits = 2 if (total_steps >= 2 and total_steps % 2 == 0) else 1
    steps_per_split = total_steps // n_splits
    n_buf = 3 if total_steps >= 3 else 2

    needed = n_buf * m * tk * itemsize + resident_out
    vmem_limit = max(needed + (4 << 20), 16 << 20)
    vmem_limit = min(vmem_limit, phys)        # never ask for more than physical
    # TODO(synk): for very large M (resident Gram >~ VMEM budget) switch to a
    # 3-D (i, j, k) grid with (tm, tm) output tiles instead of a fully
    # resident (M, M) block.
    return k_pad, tk, n_splits, steps_per_split, n_buf, int(vmem_limit)


# ----------------------------- kernel ---------------------------------------


def _gram_kernel(feat_ref, g_ref):
    """Accumulate one split's partial Gram directly into its resident output
    block across the K ('arbitrary') grid axis."""
    kk = pl.program_id(1)

    @pl.when(kk == 0)
    def _init():
        g_ref[...] = jnp.zeros_like(g_ref)

    f = feat_ref[...]
    # NT matmul on the MXU: contract the K (lane) dim of both operands.
    # Avoids materializing f.T (XLU transpose + extra VMEM copy).
    g_ref[...] += lax.dot_general(
        f, f, dimension_numbers=(((1,), (1,)), ((), ())),
        preferred_element_type=jnp.float32)


# ----------------------------- wrappers --------------------------------------


def _gram_partials(features):
    """Pallas call: (M, K) features -> (n_splits, M, M) unscaled partial Grams."""
    m, k = features.shape
    itemsize = features.dtype.itemsize
    k_pad, tk, n_splits, steps_per_split, n_buf, vmem_limit = _plan(
        m, k, itemsize)

    if k_pad != k:
        # Zero K-columns contribute nothing to the Gram sums.
        # TODO(synk): mask a ragged final K tile in-kernel (iota lane mask
        # under pl.when) to avoid this extra HBM pad pass when K % 128 != 0.
        features = jnp.pad(features, ((0, 0), (0, k_pad - k)))

    def feat_index_map(s, kk):
        return (0, s * steps_per_split + kk)

    if n_buf > 2:
        feat_spec = pl.BlockSpec((m, tk), feat_index_map,
                                 pipeline_mode=pl.Buffered(n_buf))
    else:
        feat_spec = pl.BlockSpec((m, tk), feat_index_map)

    return pl.pallas_call(
        _gram_kernel,
        out_shape=jax.ShapeDtypeStruct((n_splits, m, m), jnp.float32),
        grid_spec=pltpu.PrefetchScalarGridSpec(
            num_scalar_prefetch=0,
            grid=(n_splits, steps_per_split),
            in_specs=[feat_spec],
            out_specs=pl.BlockSpec((None, m, m), lambda s, kk: (s, 0, 0))),
        compiler_params=pltpu.CompilerParams(
            dimension_semantics=("parallel", "arbitrary"),
            vmem_limit_bytes=vmem_limit),
        cost_estimate=pl.CostEstimate(
            flops=2 * m * m * k_pad,
            transcendentals=0,
            bytes_accessed=m * k_pad * itemsize + n_splits * m * m * 4),
    )(features)


def _gram_from_features(features):
    m, k = features.shape
    partials = _gram_partials(features)
    g = jnp.sum(partials, axis=0)            # tiny (M, M) combine in XLA
    return g * (1.0 / float(m * k))          # == 1 / (a*b*c*d)


@jax.jit
def _gram_pallas(features):
    """Target-Gram path (init): true (M, M) f32 Gram, scaled."""
    return _gram_from_features(features)


@jax.jit
def _style_loss_pallas(features, target):
    """Forward path: Gram of `features` vs. `target`; returns scalar MSE."""
    g = _gram_from_features(features)
    diff = g - target
    return jnp.mean(diff * diff)


class StyleLoss:
    """JAX/Pallas port of the PyTorch StyleLoss module (forward only)."""

    # TODO(synk): add a jax.custom_vjp around the Gram kernel so jax.grad of
    # the loss w.r.t. the input image works (needed for the optimization loop
    # of style transfer); forward semantics match the PyTorch module.

    def __init__(self, target_feature):
        a, b, c, d = target_feature.shape
        feats = target_feature.reshape(a * b, c * d)
        self.target = _gram_pallas(feats)     # true (N*C, N*C) f32 Gram
        self.loss = None

    def __call__(self, x):
        a, b, c, d = x.shape
        feats = x.reshape(a * b, c * d)
        self.loss = _style_loss_pallas(feats, self.target)
        return x  # forward returns the input unchanged, as in PyTorch


def _gram_matrix_ref(x):
    a, b, c, d = x.shape
    f = x.reshape(a * b, c * d).astype(jnp.float32)
    return (f @ f.T) / (a * b * c * d)


if __name__ == "__main__":
    key = jax.random.PRNGKey(0)
    k_t, k_x = jax.random.split(key)

    # Small shapes consistent with the module: NCHW feature maps.
    target_feature = jax.random.normal(k_t, (2, 4, 16, 16), dtype=jnp.float32)
    x = jax.random.normal(k_x, (2, 4, 16, 16), dtype=jnp.float32)

    module = StyleLoss(target_feature)
    out = module(x)
    out = jax.block_until_ready(out)
    loss = jax.block_until_ready(module.loss)

    # Pure-JAX reference check.
    g_ref = _gram_matrix_ref(x)
    t_ref = _gram_matrix_ref(target_feature)
    loss_ref = jnp.mean((g_ref - t_ref) ** 2)

    assert out.shape == x.shape
    assert jnp.allclose(out, x)
    assert jnp.allclose(module.target, t_ref, rtol=1e-5, atol=1e-5)
    assert jnp.allclose(loss, loss_ref, rtol=1e-5, atol=1e-6)

    print("KERNEL_OK")
</pallas_src>

<mosaic_0001>
module attributes {stable_mosaic.version = 11 : i64} {
  func.func @_gram_kernel(%arg0: i32, %arg1: i32, %arg2: memref<8x128xf32, #tpu.memory_space<vmem>>, %arg3: memref<1x8x8xf32, #tpu.memory_space<vmem>>) attributes {dimension_semantics = [#tpu.dimension_semantics<parallel>, #tpu.dimension_semantics<arbitrary>], iteration_bounds = array<i64: 2, 1>, scalar_prefetch = 0 : i64, scratch_operands = 0 : i64, tpu.core_type = #tpu.core_type<tc>, window_params = [{transform_indices = @transform_0, window_bounds = array<i64: 8, 128>}, {transform_indices = @transform_1, window_bounds = array<i64: 1, 8, 8>}]} {
    %c0_i32 = arith.constant 0 : i32
    %0 = arith.cmpi eq, %arg1, %c0_i32 : i32
    %1 = arith.extui %0 : i1 to i32
    %c0_i32_0 = arith.constant 0 : i32
    %2 = arith.cmpi ne, %1, %c0_i32_0 : i32
    scf.if %2 {
      %cst_8 = arith.constant 0.000000e+00 : f32
      %11 = vector.broadcast %cst_8 : f32 to vector<8x8xf32>
      %c0_9 = arith.constant 0 : index
      %c0_10 = arith.constant 0 : index
      %c0_11 = arith.constant 0 : index
      %12 = vector.load %arg3[%c0_9, %c0_10, %c0_11] : memref<1x8x8xf32, #tpu.memory_space<vmem>>, vector<1x8x8xf32>
      %13 = vector.shape_cast %12 : vector<1x8x8xf32> to vector<8x8xf32>
      %14 = vector.shape_cast %11 : vector<8x8xf32> to vector<1x8x8xf32>
      tpu.vector_store %arg3[%c0_9, %c0_10, %c0_11], %14 {strides = array<i32>} : memref<1x8x8xf32, #tpu.memory_space<vmem>>, vector<1x8x8xf32>,
    } else {
    }
    %c0 = arith.constant 0 : index
    %c0_1 = arith.constant 0 : index
    %3 = vector.load %arg2[%c0, %c0_1] : memref<8x128xf32, #tpu.memory_space<vmem>>, vector<8x128xf32>
    %c0_2 = arith.constant 0 : index
    %c0_3 = arith.constant 0 : index
    %c0_4 = arith.constant 0 : index
    %4 = vector.load %arg3[%c0_2, %c0_3, %c0_4] : memref<1x8x8xf32, #tpu.memory_space<vmem>>, vector<1x8x8xf32>
    %5 = vector.shape_cast %4 : vector<1x8x8xf32> to vector<8x8xf32>
    %cst = arith.constant dense<0.000000e+00> : vector<8x8xf32>
    %6 = tpu.matmul %3, %3, %cst {dimension_numbers = #tpu.dot_dimension_numbers<[1], [1], [0], [0], [0, 0, 1, 0], [], []>} : vector<8x128xf32>, vector<8x128xf32>, vector<8x8xf32> -> vector<8x8xf32>
    %7 = arith.addf %5, %6 : vector<8x8xf32>
    %c0_5 = arith.constant 0 : index
    %c0_6 = arith.constant 0 : index
    %c0_7 = arith.constant 0 : index
    %8 = vector.load %arg3[%c0_5, %c0_6, %c0_7] : memref<1x8x8xf32, #tpu.memory_space<vmem>>, vector<1x8x8xf32>
    %9 = vector.shape_cast %8 : vector<1x8x8xf32> to vector<8x8xf32>
    %10 = vector.shape_cast %7 : vector<8x8xf32> to vector<1x8x8xf32>
    tpu.vector_store %arg3[%c0_5, %c0_6, %c0_7], %10 {strides = array<i32>} : memref<1x8x8xf32, #tpu.memory_space<vmem>>, vector<1x8x8xf32>,
    return
  }
  func.func @transform_0(%arg0: i32, %arg1: i32) -> (i32, i32) {
    %c1_i32 = arith.constant 1 : i32
    %0 = arith.muli %arg0, %c1_i32 : i32
    %1 = arith.addi %0, %arg1 : i32
    %c0_i32 = arith.constant 0 : i32
    %c0_i32_0 = arith.constant 0 : i32
    return %c0_i32, %1 : i32, i32
  }
  func.func @transform_1(%arg0: i32, %arg1: i32) -> (i32, i32, i32) {
    %c0_i32 = arith.constant 0 : i32
    %c0_i32_0 = arith.constant 0 : i32
    %c0_i32_1 = arith.constant 0 : i32
    return %arg0, %c0_i32, %c0_i32_0 : i32, i32, i32
  }
}

</mosaic_0001>

<llo_original>
// kernel: _gram_pallas.1
$region0: #{_gram_pallas.1}
  #allocation0 [shape = 'u32[]', space=smem, size = 0x4, offset = 0x4, fixed_abs, tag = 'smem constant byte address 0x4 - core index']
  #allocation1 [shape = 'u32[144,128]{1,0:T(1,128)}', space=vmem, size = 0x12000, scoped, tag = 'internal scratch']
  %s0 = inlined_call_operand.hbm [shape: f32[8,256], index: 0, kind: input, shape index: {}]
  %s1 = inlined_call_operand.vmem [shape: f32[2,8,8], index: 1, kind: output, shape index: {}]
  %s2 = sld [smem:[#allocation0]]
  $region45: #{_gram_pallas.1} parent=0
    _
  %s4 = ssub.s32 1, %s2
  %s5 = scalar_select 0, %s4, %s2
  $region1: #{_gram_pallas.1} parent=0
    #allocation2 [shape = 'u8[8192]{0}', space=vmem, size = 0x2000, scoped, tag = 'input window, operand 0']
    #allocation3 [shape = 's32[2]{0}', space=sflag, size = 0x8, scoped, tag = 'scoped memory for _gram_pallas.1']
    %6 = vsyncpa [#allocation3], 0
    %s7 = scalar_lea.sflag [#allocation3], 1
    %8 = vsyncpa %s7, 0
    loop: start=0, step=1, limit=4
    $region2: #{_gram_pallas.1} parent=1 // loop_pre_header
      _
    $region3: #{_gram_pallas.1} parent=1 // loop_header
      %s10 = sphi 0, %s14
      %p11 = scmp.ge.s32.totalorder %s10, 4
      %s17 = sphi 0, %s29
      %s18 = sphi 0, %s25
      %s19 = sphi 0, %s17
      %s20 = sphi 0, %s18
      %s21 = sphi 0, %s19
      %s22 = sphi 0, %s20
      %s34 = sphi 0, %s36
      %s37 = sphi 0, %s34
      %s38 = sphi 0, %s37
      %s54 = sphi 0, %s38
      %s60 = sphi 0, %s62
      %s63 = sphi 0, %s60
      %s64 = sphi 0, %s63
      %s80 = sphi 0, %s64
    $region4: #{_gram_pallas.1} parent=1 // loop_header_branch
      %13 = sbr.rel (%p11) target = $region8
    $region5: #{_gram_pallas.1} parent=1 // loop_body
      %s15 = ssub.s32 %s10, 1
      %s16 = ssub.s32 %s10, 2
      %s23 = sadd.s32 1, %s18
      %p24 = scmp.ge.s32.totalorder %s23, 1
      %s25 = scalar_select %p24, 0, %s23
      %s26 = sadd.s32 1, %s17
      %s27 = scalar_select %p24, %s26, %s17
      %p28 = scmp.ge.s32.totalorder %s27, 2
      %s29 = scalar_select %p28, 0, %s27
      %s30 = sadd.s32 %s17, %s18
      %s31 = sadd.s32 %s29, %s25
      %s32 = ssub.s32 %s30, %s31
      %p33 = scmp.eq.s32.totalorder %s32, 0
      %s35 = sadd.s32 %s34, 1
      %s36 = scalar_select %p33, %s34, %s35
      %p39 = pneg %p33
      %p40 = scmp.eq.s32.totalorder %s10, 1
      %p41 = por %p39, %p40
      %p42 = scmp.ne.s32.totalorder %s34, %s37
      %p43 = scmp.eq.s32.totalorder %s10, 0
      %p44 = por %p42, %p43
      %p45 = scmp.ne.s32.totalorder %s34, %s37
      %p46 = scmp.eq.s32.totalorder %s15, 1
      %p47 = por %p45, %p46
      %p48 = scmp.ne.s32.totalorder %s37, %s38
      %p49 = scmp.eq.s32.totalorder %s15, 0
      %p50 = por %p48, %p49
      %p51 = scmp.ne.s32.totalorder %s37, %s38
      %p52 = scmp.eq.s32.totalorder %s16, 1
      %p53 = por %p51, %p52
      %p55 = scmp.ne.s32.totalorder %s38, %s54
      %p56 = scmp.eq.s32.totalorder %s16, 0
      %p57 = por %p55, %p56
      %s58 = ssub.s32 %s17, %s29
      %p59 = scmp.eq.s32.totalorder %s58, 0
      %s61 = sadd.s32 %s60, 1
      %s62 = scalar_select %p59, %s60, %s61
      %p65 = pneg %p59
      %p66 = scmp.eq.s32.totalorder %s10, 1
      %p67 = por %p65, %p66
      %p68 = scmp.ne.s32.totalorder %s60, %s63
      %p69 = scmp.eq.s32.totalorder %s10, 0
      %p70 = por %p68, %p69
      %p71 = scmp.ne.s32.totalorder %s60, %s63
      %p72 = scmp.eq.s32.totalorder %s15, 1
      %p73 = por %p71, %p72
      %p74 = scmp.ne.s32.totalorder %s63, %s64
      %p75 = scmp.eq.s32.totalorder %s15, 0
      %p76 = por %p74, %p75
      %p77 = scmp.ne.s32.totalorder %s63, %s64
      %p78 = scmp.eq.s32.totalorder %s16, 1
      %p79 = por %p77, %p78
      %p81 = scmp.ne.s32.totalorder %s64, %s80
      %p82 = scmp.eq.s32.totalorder %s16, 0
      %p83 = por %p81, %p82
      %p84 = scmp.le.s32.totalorder 1, %s10
      %p85 = scmp.lt.s32.totalorder %s10, 3
      %p86 = pnand %p84, %p85
      %p87 = pneg %p86
      // Predicated region
      $region9: #{_gram_pallas.1} parent=5 // pred_check
        _
      $region10: #{_gram_pallas.1} parent=5 // pred_check_branch
        %89 = sbr.rel (%p86) target = $region12
      $region11: #{_gram_pallas.1} parent=5 // pred_region
        %s90 = ssub.s32 %s10, 1
      $region12: #{_gram_pallas.1} parent=5 // pred_fallthru
        _
      %p91 = scmp.lt.s32.totalorder %s10, 2
      // Predicated region
      $region13: #{_gram_pallas.1} parent=5 // pred_check
        %p92 = pneg %p91
      $region14: #{_gram_pallas.1} parent=5 // pred_check_branch
        %94 = sbr.rel (%p92) target = $region16
      $region15: #{_gram_pallas.1} parent=5 // pred_region
        // Predicated region
        $region17: #{_gram_pallas.1} parent=15 // pred_check
          %p95 = pneg %p44
        $region18: #{_gram_pallas.1} parent=15 // pred_check_branch
          %97 = sbr.rel (%p95) target = $region20
        $region19: #{_gram_pallas.1} parent=15 // pred_region
          %s98 = sand.u32 %s34, 1
          %s99 = scalar_lea.sflag [#allocation3], %s98
          %s100 = sand.u32 %s34, 1
          %s101 = smul.addr %s100, 8
          %s102 = scalar_lea.vmem [#allocation2], %s101
          %s103 = sadd.s32 %s17, %s18
          %s105 = ssub.s32 128, 128
          %106 = vsyncadd %s99, %s105
          %s107 = smul.addr %s103, 128
          %s108 = scalar_lea.hbm %s0, %s107
          %s110 = sshll.u32 %s102, 4
          %s111 = int_to_ptr.vmem [resolvable:$true] %s110
          %113 = dma.hbm_to_vmem [thread:$0]  %s108, 128, %s111, %s99
        $region20: #{_gram_pallas.1} parent=15 // pred_fallthru
          _
      $region16: #{_gram_pallas.1} parent=5 // pred_fallthru
        _
      %p114 = scmp.le.s32.totalorder 1, %s10
      %p115 = scmp.lt.s32.totalorder %s10, 3
      %p116 = pnand %p114, %p115
      %p117 = pneg %p116
      // Predicated region
      $region21: #{_gram_pallas.1} parent=5 // pred_check
        _
      $region22: #{_gram_pallas.1} parent=5 // pred_check_branch
        %119 = sbr.rel (%p116) target = $region24
      $region23: #{_gram_pallas.1} parent=5 // pred_region
        %s120 = ssub.s32 %s10, 1
        %s121 = sand.u32 %s37, 1
        %s122 = scalar_lea.sflag [#allocation3], %s121
        %s123 = sand.u32 %s37, 1
        %s124 = smul.addr %s123, 8
        %s125 = scalar_lea.vmem [#allocation2], %s124
        // Predicated region
        $region25: #{_gram_pallas.1} parent=23 // pred_check
          %p126 = pneg %p50
        $region26: #{_gram_pallas.1} parent=23 // pred_check_branch
          %128 = sbr.rel (%p126) target = $region28
        $region27: #{_gram_pallas.1} parent=23 // pred_region
          %129 = dma.done %s122, 128
        $region28: #{_gram_pallas.1} parent=23 // pred_fallthru
          _
        %s130 = sand.u32 %s37, 1
        %s131 = scalar_lea.sflag [#allocation3], %s130
        %s132 = sand.u32 %s37, 1
        %s133 = smul.addr %s132, 8
        %s134 = scalar_lea.vmem [#allocation2], %s133
        %p135 = pneg %p50
        %p136 = pneg %p47
        %p137 = pneg %p76
        %p138 = pneg %p73
        %p139 = scmp.lt.s32.totalorder %s19, 1
        %s140 = scalar_select %p139, %s19, 1
        %s141 = smul.addr %s140, 8
        %s142 = scalar_lea.vmem %s1, %s141
        %s143 = sadd.s32 %s19, %s20
        %p144 = scmp.lt.s32.totalorder %s19, 1
        %s145 = scalar_select %p144, %s19, 1
        %s146 = smul.addr %s145, 8
        %s147 = scalar_lea.vmem %s1, %s146
        %p148 = scmp.eq.s32.totalorder %s20, 0
        // Predicated region
        $region29: #{_gram_pallas.1} parent=23 // pred_check
          %p149 = pneg %p148
        $region30: #{_gram_pallas.1} parent=23 // pred_check_branch
          %151 = sbr.rel (%p149) target = $region32
        $region31: #{_gram_pallas.1} parent=23 // pred_region
          %vm152 = vcmask 64512
          %153 = vst.msk [vmem:[%s147] sm:$0xff] %vm152, 0.0
        $region32: #{_gram_pallas.1} parent=23 // pred_fallthru
          _
        %v154 = vld [vmem:[%s125] sm:$0xff]
        %v155 = vld [vmem:[%s147] sm:$0xff]
        %156 = vmatprep.subr.mxu0 0.0
        %157 = vmatpush1.xpose.msra.mxu0 %v154
        %158 = vmatprep.subr.mxu0 0.0
        %159 = vmatpush1.xpose.msra.mxu0 0.0
        %160 = vmatprep.subr.mxu0 0.0
        %161 = vmatpush1.xpose.msra.mxu0 0.0
        %162 = vmatprep.subr.mxu0 0.0
        %163 = vmatpush1.xpose.msra.mxu0 0.0
        %164 = vmatprep.subr.mxu0 0.0
        %165 = vmatpush1.xpose.msra.mxu0 0.0
        %166 = vmatprep.subr.mxu0 0.0
        %167 = vmatpush1.xpose.msra.mxu0 0.0
        %168 = vmatprep.subr.mxu0 0.0
        %169 = vmatpush1.xpose.msra.mxu0 0.0
        %170 = vmatprep.subr.mxu0 0.0
        %171 = vmatpush1.xpose.msra.mxu0 0.0
        %172 = vmatprep.subr.mxu0 0.0
        %173 = vmatpush1.xpose.msra.mxu0 0.0
        %174 = vmatprep.subr.mxu0 0.0
        %175 = vmatpush1.xpose.msra.mxu0 0.0
        %176 = vmatprep.subr.mxu0 0.0
        %177 = vmatpush1.xpose.msra.mxu0 0.0
        %178 = vmatprep.subr.mxu0 0.0
        %179 = vmatpush1.xpose.msra.mxu0 0.0
        %180 = vmatprep.subr.mxu0 0.0
        %181 = vmatpush1.xpose.msra.mxu0 0.0
        %182 = vmatprep.subr.mxu0 0.0
        %183 = vmatpush1.xpose.msra.mxu0 0.0
        %184 = vmatprep.subr.mxu0 0.0
        %185 = vmatpush1.xpose.msra.mxu0 0.0
        %186 = vmatprep.subr.mxu0 0.0
        %187 = vmatpush1.xpose.msra.mxu0 0.0
        %188 = vmatprep.subr.mxu0 0.0
        %189 = vmatpush1.xpose.msra.mxu0 0.0
        %190 = vmatprep.subr.mxu0 0.0
        %191 = vmatpush1.xpose.msra.mxu0 0.0
        %192 = vmatprep.subr.mxu0 0.0
        %193 = vmatpush1.xpose.msra.mxu0 0.0
        %194 = vmatprep.subr.mxu0 0.0
        %195 = vmatpush1.xpose.msra.mxu0 0.0
        %196 = vmatprep.subr.mxu0 0.0
        %197 = vmatpush1.xpose.msra.mxu0 0.0
        %198 = vmatprep.subr.mxu0 0.0
        %199 = vmatpush1.xpose.msra.mxu0 0.0
        %200 = vmatprep.subr.mxu0 0.0
        %201 = vmatpush1.xpose.msra.mxu0 0.0
        %202 = vmatprep.subr.mxu0 0.0
        %203 = vmatpush1.xpose.msra.mxu0 0.0
        %204 = vmatprep.subr.mxu0 0.0
        %205 = vmatpush1.xpose.msra.mxu0 0.0
        %206 = vmatprep.subr.mxu0 0.0
        %207 = vmatpush1.xpose.msra.mxu0 0.0
        %208 = vmatprep.subr.mxu0 0.0
        %209 = vmatpush1.xpose.msra.mxu0 0.0
        %210 = vmatprep.subr.mxu0 0.0
        %211 = vmatpush1.xpose.msra.mxu0 0.0
        %212 = vmatprep.subr.mxu0 0.0
        %213 = vmatpush1.xpose.msra.mxu0 0.0
        %214 = vmatprep.subr.mxu0 0.0
        %215 = vmatpush1.xpose.msra.mxu0 0.0
        %216 = vmatprep.subr.mxu0 0.0
        %217 = vmatpush1.xpose.msra.mxu0 0.0
        %218 = vmatprep.subr.mxu0 0.0
        %219 = vmatpush1.xpose.msra.mxu0 0.0
        %220 = vmatprep.mubr.f32.mxu0 0.0
        %221 = vmatmul.mubr.f32.gmra.mrb[0].mxu0 %v154
        %v222 = vpop.f32.mrb[0].mxu0
        %v223 = vadd.f32 0.0, %v222
        %v224 = vpop.f32.mrb[0].mxu0
        %225 = vdwg.mxu0
        %v226 = vadd.f32 %v155, %v223
        %vm227 = vcmask 64512
        %228 = vst.msk [vmem:[%s147] sm:$0xff] %vm227, %v226
        %p229 = scmp.lt.s32.totalorder %s19, 1
        %s230 = scalar_select %p229, %s19, 1
        %s231 = smul.addr %s230, 8
        %s232 = scalar_lea.vmem %s1, %s231
        // Predicated region
        $region33: #{_gram_pallas.1} parent=23 // pred_check
          %p233 = pneg %p73
        $region34: #{_gram_pallas.1} parent=23 // pred_check_branch
          %235 = sbr.rel (%p233) target = $region36
        $region35: #{_gram_pallas.1} parent=23 // pred_region
          _
        $region36: #{_gram_pallas.1} parent=23 // pred_fallthru
          _
      $region24: #{_gram_pallas.1} parent=5 // pred_fallthru
        _
      %p236 = scmp.le.s32.totalorder 2, %s10
      // Predicated region
      $region37: #{_gram_pallas.1} parent=5 // pred_check
        %p237 = pneg %p236
      $region38: #{_gram_pallas.1} parent=5 // pred_check_branch
        %239 = sbr.rel (%p237) target = $region40
      $region39: #{_gram_pallas.1} parent=5 // pred_region
        %s240 = ssub.s32 %s10, 2
        // Predicated region
        $region41: #{_gram_pallas.1} parent=39 // pred_check
          %p241 = pneg %p79
        $region42: #{_gram_pallas.1} parent=39 // pred_check_branch
          %243 = sbr.rel (%p241) target = $region44
        $region43: #{_gram_pallas.1} parent=39 // pred_region
          %p244 = scmp.lt.s32.totalorder %s21, 1
          %s245 = scalar_select %p244, %s21, 1
          %s246 = smul.addr %s245, 8
          %s247 = scalar_lea.vmem %s1, %s246
        $region44: #{_gram_pallas.1} parent=39 // pred_fallthru
          _
      $region40: #{_gram_pallas.1} parent=5 // pred_fallthru
        _
    $region6: #{_gram_pallas.1} parent=1 // loop_footer
      %s14 = sadd.s32 1, %s10
    $region7: #{_gram_pallas.1} parent=1 // loop_footer_branch
      %9 = sbr.rel target = $region3
    $region8: #{_gram_pallas.1} parent=1 // loop_exit
      _
    %248 = vsyncpa [#allocation3], 1
    %s249 = scalar_lea.sflag [#allocation3], 1
    %250 = vsyncpa %s249, 1

</llo_original>
